<compile_context>
chip_gen: v5e
topology: v5e:2x2
jax: 0.10.0
libtpu: 0.0.40
codegen_flags: <defaults>
</compile_context>

<pallas_src>
import functools

import jax
import jax.numpy as jnp
from jax.experimental import pallas as pl
from jax.experimental.pallas import tpu as pltpu


# -------------------- argument routing (pure Python glue) --------------------
def route_args(router, args, depth):
    routed_args = [(dict(), dict()) for _ in range(depth)]
    matched_keys = [key for key in args.keys() if key in router]
    for key in matched_keys:
        val = args[key]
        for d, ((f_args, g_args), routes) in enumerate(zip(routed_args, router[key])):
            new_f_args, new_g_args = map(
                lambda route: {key: val} if route else {}, routes
            )
            routed_args[d] = ({**f_args, **new_f_args}, {**g_args, **new_g_args})
    return routed_args


def _round_up(n, m):
    return ((n + m - 1) // m) * m


# ----------------------- fused residual-FF chain kernel ----------------------
def _ff_chain_kernel(x_ref, w1_ref, w2_ref, o_ref, x_acc, y_acc):
    """One grid step: (row tile i, layer l, hidden tile h).

    x_acc : (tm, D) f32 — the residual stream, carried across l and h.
    y_acc : (tm, D) f32 — accumulates  gelu(x @ W1[:, h]) @ W2[h, :]  over h.
    """
    l = pl.program_id(1)
    h = pl.program_id(2)
    last_l = pl.num_programs(1) - 1
    last_h = pl.num_programs(2) - 1

    # Load the activation tile into the carried accumulator once per row tile.
    @pl.when(jnp.logical_and(l == 0, h == 0))
    def _():
        x_acc[...] = x_ref[...].astype(jnp.float32)

    # Reset the per-layer FF accumulator at the start of every layer.
    @pl.when(h == 0)
    def _():
        y_acc[...] = jnp.zeros_like(y_acc)

    # Feed the MXU in the weights' native dtype (bf16 stays bf16); f32 accum.
    x_in = x_acc[...].astype(w1_ref.dtype)
    hid = jnp.dot(x_in, w1_ref[0], preferred_element_type=jnp.float32)
    # NOTE: tanh-approx GELU (PyTorch nn.GELU default is exact erf; the
    # in-script reference uses the same approximation so results match).
    hid = jax.nn.gelu(hid)
    y_acc[...] += jnp.dot(hid.astype(w2_ref.dtype), w2_ref[0],
                          preferred_element_type=jnp.float32)

    # End of a layer: fold the FF output back into the residual stream.
    @pl.when(h == last_h)
    def _():
        x_acc[...] = x_acc[...] + y_acc[...]

    # End of the whole chain for this row tile: write the output once.
    @pl.when(jnp.logical_and(l == last_l, h == last_h))
    def _():
        o_ref[...] = x_acc[...].astype(o_ref.dtype)


@functools.partial(jax.jit, static_argnames=("tm_hint", "th_hint"))
def ff_chain(x2d, w1_stack, w2_stack, *, tm_hint=256, th_hint=512):
    """x2d: (M, D), w1_stack: (L, D, H), w2_stack: (L, H, D).

    Computes, for l = 0..L-1:  x = x + gelu(x @ W1[l]) @ W2[l]
    with the whole chain fused into a single Pallas kernel.
    """
    M, D = x2d.shape
    L, _, H = w1_stack.shape
    assert w1_stack.shape == (L, D, H) and w2_stack.shape == (L, H, D)

    # Lane-dense / (8,128)-friendly padding (zero padding is inert: gelu(0)=0).
    D_pad = _round_up(D, 128)
    H_pad = _round_up(H, 128)
    tm = min(tm_hint, _round_up(M, 8))
    th = min(th_hint, H_pad)
    M_pad = _round_up(M, tm)
    H_pad = _round_up(H_pad, th)

    x_p = jnp.pad(x2d, ((0, M_pad - M), (0, D_pad - D)))
    w1_p = jnp.pad(w1_stack, ((0, 0), (0, D_pad - D), (0, H_pad - H)))
    w2_p = jnp.pad(w2_stack, ((0, 0), (0, H_pad - H), (0, D_pad - D)))

    # Explicit VMEM budget: 2x (double buffer) per input/output block + scratch.
    itemsize = x_p.dtype.itemsize
    est = 2 * itemsize * (tm * D_pad          # x tile
                          + D_pad * th        # W1 tile
                          + th * D_pad        # W2 tile
                          + tm * D_pad)       # out tile
    est += 2 * tm * D_pad * 4                 # two f32 scratch accumulators
    vmem_limit = int(min(max(2 * est, 32 << 20), 64 << 20))

    grid = (M_pad // tm, L, H_pad // th)

    out = pl.pallas_call(
        _ff_chain_kernel,
        out_shape=jax.ShapeDtypeStruct((M_pad, D_pad), x2d.dtype),
        grid_spec=pltpu.PrefetchScalarGridSpec(
            num_scalar_prefetch=0,
            grid=grid,
            in_specs=[
                pl.BlockSpec((tm, D_pad), lambda i, l, h: (i, 0)),
                pl.BlockSpec((1, D_pad, th), lambda i, l, h: (l, 0, h)),
                pl.BlockSpec((1, th, D_pad), lambda i, l, h: (l, h, 0)),
            ],
            out_specs=pl.BlockSpec((tm, D_pad), lambda i, l, h: (i, 0)),
            scratch_shapes=[
                pltpu.VMEM((tm, D_pad), jnp.float32),
                pltpu.VMEM((tm, D_pad), jnp.float32),
            ],
        ),
        compiler_params=pltpu.CompilerParams(
            dimension_semantics=("parallel", "arbitrary", "arbitrary"),
            vmem_limit_bytes=vmem_limit,
        ),
    )(x_p, w1_p, w2_p)

    return out[:M, :D]


# ---------------------- SequentialSequence (JAX version) ---------------------
class SequentialSequence:
    """layers: list of ((f_w1, f_w2), (g_w1, g_w2)) feed-forward params."""

    def __init__(self, layers, args_route={}):
        assert all(
            len(route) == len(layers) for route in args_route.values()
        ), "each argument route map must have the same depth as the number of sequential layers"
        self.layers = layers
        self.args_route = args_route
        # Stack per-layer weights once, in execution order [f0, g0, f1, g1, ...].
        w1s, w2s = [], []
        for (f_w1, f_w2), (g_w1, g_w2) in layers:
            w1s += [f_w1, g_w1]
            w2s += [f_w2, g_w2]
        self.w1_stack = jnp.stack(w1s)  # (2*depth, D, H)
        self.w2_stack = jnp.stack(w2s)  # (2*depth, H, D)

    def __call__(self, x, **kwargs):
        # route_args is pure Python glue; the synthetic FF blocks take no extra
        # kwargs here (all routes empty), matching the reference semantics.
        _routed = route_args(self.args_route, kwargs, len(self.layers))
        # TODO(synk): routed kwargs would be forwarded to real f/g callables.
        B, N, D = x.shape
        x2d = x.reshape(B * N, D)
        y2d = ff_chain(x2d, self.w1_stack, self.w2_stack)
        return y2d.reshape(B, N, D)


# ----------------------------------- main ------------------------------------
if __name__ == "__main__":
    B, N, D, H = 2, 8, 32, 64
    depth = 2

    key = jax.random.PRNGKey(0)
    kx, kw = jax.random.split(key)
    x = jax.random.normal(kx, (B, N, D), dtype=jnp.float32)

    # Deterministic parameter init: depth layers, each with (f, g) FF blocks.
    layers = []
    wkeys = jax.random.split(kw, depth * 4)
    scale1 = 1.0 / jnp.sqrt(D)
    scale2 = 1.0 / jnp.sqrt(H)
    for d in range(depth):
        f_w1 = jax.random.normal(wkeys[4 * d + 0], (D, H), jnp.float32) * scale1
        f_w2 = jax.random.normal(wkeys[4 * d + 1], (H, D), jnp.float32) * scale2
        g_w1 = jax.random.normal(wkeys[4 * d + 2], (D, H), jnp.float32) * scale1
        g_w2 = jax.random.normal(wkeys[4 * d + 3], (H, D), jnp.float32) * scale2
        layers.append(((f_w1, f_w2), (g_w1, g_w2)))

    model = SequentialSequence(layers, args_route={})
    out = model(x)
    jax.block_until_ready(out)

    # Reference check in plain JAX (same math, no Pallas).
    def ref_forward(x):
        x2d = x.reshape(B * N, D)
        for (fw1, fw2), (gw1, gw2) in layers:
            x2d = x2d + jax.nn.gelu(x2d @ fw1) @ fw2
            x2d = x2d + jax.nn.gelu(x2d @ gw1) @ gw2
        return x2d.reshape(B, N, D)

    ref = ref_forward(x)
    assert out.shape == (B, N, D)
    assert jnp.allclose(out, ref, atol=1e-4, rtol=1e-4)

    print("KERNEL_OK")
</pallas_src>

<mosaic_0001>
module attributes {stable_mosaic.version = 11 : i64} {
  func.func @_ff_chain_kernel(%arg0: i32, %arg1: i32, %arg2: i32, %arg3: memref<16x128xf32, #tpu.memory_space<vmem>>, %arg4: memref<1x128x128xf32, #tpu.memory_space<vmem>>, %arg5: memref<1x128x128xf32, #tpu.memory_space<vmem>>, %arg6: memref<16x128xf32, #tpu.memory_space<vmem>>, %arg7: memref<16x128xf32, #tpu.memory_space<vmem>>, %arg8: memref<16x128xf32, #tpu.memory_space<vmem>>) attributes {dimension_semantics = [#tpu.dimension_semantics<parallel>, #tpu.dimension_semantics<arbitrary>, #tpu.dimension_semantics<arbitrary>], iteration_bounds = array<i64: 1, 4, 1>, scalar_prefetch = 0 : i64, scratch_operands = 2 : i64, tpu.core_type = #tpu.core_type<tc>, window_params = [{transform_indices = @transform_0, window_bounds = array<i64: 16, 128>}, {transform_indices = @transform_1, window_bounds = array<i64: 1, 128, 128>}, {transform_indices = @transform_2, window_bounds = array<i64: 1, 128, 128>}, {transform_indices = @transform_3, window_bounds = array<i64: 16, 128>}]} {
    %c0_i32 = arith.constant 0 : i32
    %0 = arith.cmpi eq, %arg1, %c0_i32 : i32
    %c0_i32_0 = arith.constant 0 : i32
    %1 = arith.cmpi eq, %arg2, %c0_i32_0 : i32
    %2 = arith.andi %0, %1 : i1
    %3 = arith.extui %2 : i1 to i32
    %c0_i32_1 = arith.constant 0 : i32
    %4 = arith.cmpi ne, %3, %c0_i32_1 : i32
    scf.if %4 {
      %c0_24 = arith.constant 0 : index
      %c0_25 = arith.constant 0 : index
      %39 = vector.load %arg3[%c0_24, %c0_25] : memref<16x128xf32, #tpu.memory_space<vmem>>, vector<16x128xf32>
      %c0_26 = arith.constant 0 : index
      %c0_27 = arith.constant 0 : index
      %40 = vector.load %arg7[%c0_26, %c0_27] : memref<16x128xf32, #tpu.memory_space<vmem>>, vector<16x128xf32>
      tpu.vector_store %arg7[%c0_26, %c0_27], %39 {strides = array<i32>} : memref<16x128xf32, #tpu.memory_space<vmem>>, vector<16x128xf32>,
    } else {
    }
    %c0_i32_2 = arith.constant 0 : i32
    %5 = arith.cmpi eq, %arg2, %c0_i32_2 : i32
    %6 = arith.extui %5 : i1 to i32
    %c0_i32_3 = arith.constant 0 : i32
    %7 = arith.cmpi ne, %6, %c0_i32_3 : i32
    scf.if %7 {
      %cst_24 = arith.constant 0.000000e+00 : f32
      %39 = vector.broadcast %cst_24 : f32 to vector<16x128xf32>
      %c0_25 = arith.constant 0 : index
      %c0_26 = arith.constant 0 : index
      %40 = vector.load %arg8[%c0_25, %c0_26] : memref<16x128xf32, #tpu.memory_space<vmem>>, vector<16x128xf32>
      tpu.vector_store %arg8[%c0_25, %c0_26], %39 {strides = array<i32>} : memref<16x128xf32, #tpu.memory_space<vmem>>, vector<16x128xf32>,
    } else {
    }
    %c0 = arith.constant 0 : index
    %c0_4 = arith.constant 0 : index
    %8 = vector.load %arg7[%c0, %c0_4] : memref<16x128xf32, #tpu.memory_space<vmem>>, vector<16x128xf32>
    %c0_5 = arith.constant 0 : index
    %c0_6 = arith.constant 0 : index
    %c0_7 = arith.constant 0 : index
    %9 = vector.load %arg4[%c0_5, %c0_6, %c0_7] : memref<1x128x128xf32, #tpu.memory_space<vmem>>, vector<1x128x128xf32>
    %10 = vector.shape_cast %9 : vector<1x128x128xf32> to vector<128x128xf32>
    %cst = arith.constant dense<0.000000e+00> : vector<16x128xf32>
    %11 = tpu.matmul %8, %10, %cst {dimension_numbers = #tpu.dot_dimension_numbers<[1], [0], [0], [1], [0, 0, 1, 1], [], []>} : vector<16x128xf32>, vector<128x128xf32>, vector<16x128xf32> -> vector<16x128xf32>
    %12 = arith.mulf %11, %11 : vector<16x128xf32>
    %13 = arith.mulf %11, %12 : vector<16x128xf32>
    %cst_8 = arith.constant 4.471500e-02 : f32
    %14 = vector.broadcast %cst_8 : f32 to vector<16x128xf32>
    %15 = arith.mulf %14, %13 : vector<16x128xf32>
    %16 = arith.addf %11, %15 : vector<16x128xf32>
    %cst_9 = arith.constant 0.797884583 : f32
    %17 = vector.broadcast %cst_9 : f32 to vector<16x128xf32>
    %18 = arith.mulf %17, %16 : vector<16x128xf32>
    %19 = math.tanh %18 : vector<16x128xf32>
    %cst_10 = arith.constant 1.000000e+00 : f32
    %20 = vector.broadcast %cst_10 : f32 to vector<16x128xf32>
    %21 = arith.addf %20, %19 : vector<16x128xf32>
    %cst_11 = arith.constant 5.000000e-01 : f32
    %22 = vector.broadcast %cst_11 : f32 to vector<16x128xf32>
    %23 = arith.mulf %22, %21 : vector<16x128xf32>
    %24 = arith.mulf %11, %23 : vector<16x128xf32>
    %c0_12 = arith.constant 0 : index
    %c0_13 = arith.constant 0 : index
    %25 = vector.load %arg8[%c0_12, %c0_13] : memref<16x128xf32, #tpu.memory_space<vmem>>, vector<16x128xf32>
    %c0_14 = arith.constant 0 : index
    %c0_15 = arith.constant 0 : index
    %c0_16 = arith.constant 0 : index
    %26 = vector.load %arg5[%c0_14, %c0_15, %c0_16] : memref<1x128x128xf32, #tpu.memory_space<vmem>>, vector<1x128x128xf32>
    %27 = vector.shape_cast %26 : vector<1x128x128xf32> to vector<128x128xf32>
    %cst_17 = arith.constant dense<0.000000e+00> : vector<16x128xf32>
    %28 = tpu.matmul %24, %27, %cst_17 {dimension_numbers = #tpu.dot_dimension_numbers<[1], [0], [0], [1], [0, 0, 1, 1], [], []>} : vector<16x128xf32>, vector<128x128xf32>, vector<16x128xf32> -> vector<16x128xf32>
    %29 = arith.addf %25, %28 : vector<16x128xf32>
    %c0_18 = arith.constant 0 : index
    %c0_19 = arith.constant 0 : index
    %30 = vector.load %arg8[%c0_18, %c0_19] : memref<16x128xf32, #tpu.memory_space<vmem>>, vector<16x128xf32>
    tpu.vector_store %arg8[%c0_18, %c0_19], %29 {strides = array<i32>} : memref<16x128xf32, #tpu.memory_space<vmem>>, vector<16x128xf32>,
    %c0_i32_20 = arith.constant 0 : i32
    %31 = arith.cmpi eq, %arg2, %c0_i32_20 : i32
    %32 = arith.extui %31 : i1 to i32
    %c0_i32_21 = arith.constant 0 : i32
    %33 = arith.cmpi ne, %32, %c0_i32_21 : i32
    scf.if %33 {
      %c0_24 = arith.constant 0 : index
      %c0_25 = arith.constant 0 : index
      %39 = vector.load %arg7[%c0_24, %c0_25] : memref<16x128xf32, #tpu.memory_space<vmem>>, vector<16x128xf32>
      %c0_26 = arith.constant 0 : index
      %c0_27 = arith.constant 0 : index
      %40 = vector.load %arg8[%c0_26, %c0_27] : memref<16x128xf32, #tpu.memory_space<vmem>>, vector<16x128xf32>
      %41 = arith.addf %39, %40 : vector<16x128xf32>
      %c0_28 = arith.constant 0 : index
      %c0_29 = arith.constant 0 : index
      %42 = vector.load %arg7[%c0_28, %c0_29] : memref<16x128xf32, #tpu.memory_space<vmem>>, vector<16x128xf32>
      tpu.vector_store %arg7[%c0_28, %c0_29], %41 {strides = array<i32>} : memref<16x128xf32, #tpu.memory_space<vmem>>, vector<16x128xf32>,
    } else {
    }
    %c3_i32 = arith.constant 3 : i32
    %34 = arith.cmpi eq, %arg1, %c3_i32 : i32
    %c0_i32_22 = arith.constant 0 : i32
    %35 = arith.cmpi eq, %arg2, %c0_i32_22 : i32
    %36 = arith.andi %34, %35 : i1
    %37 = arith.extui %36 : i1 to i32
    %c0_i32_23 = arith.constant 0 : i32
    %38 = arith.cmpi ne, %37, %c0_i32_23 : i32
    scf.if %38 {
      %c0_24 = arith.constant 0 : index
      %c0_25 = arith.constant 0 : index
      %39 = vector.load %arg7[%c0_24, %c0_25] : memref<16x128xf32, #tpu.memory_space<vmem>>, vector<16x128xf32>
      %c0_26 = arith.constant 0 : index
      %c0_27 = arith.constant 0 : index
      %40 = vector.load %arg6[%c0_26, %c0_27] : memref<16x128xf32, #tpu.memory_space<vmem>>, vector<16x128xf32>
      tpu.vector_store %arg6[%c0_26, %c0_27], %39 {strides = array<i32>} : memref<16x128xf32, #tpu.memory_space<vmem>>, vector<16x128xf32>,
    } else {
    }
    return
  }
  func.func @transform_0(%arg0: i32, %arg1: i32, %arg2: i32) -> (i32, i32) {
    %c0_i32 = arith.constant 0 : i32
    %c0_i32_0 = arith.constant 0 : i32
    return %arg0, %c0_i32 : i32, i32
  }
  func.func @transform_1(%arg0: i32, %arg1: i32, %arg2: i32) -> (i32, i32, i32) {
    %c0_i32 = arith.constant 0 : i32
    %c0_i32_0 = arith.constant 0 : i32
    return %arg1, %c0_i32, %arg2 : i32, i32, i32
  }
  func.func @transform_2(%arg0: i32, %arg1: i32, %arg2: i32) -> (i32, i32, i32) {
    %c0_i32 = arith.constant 0 : i32
    %c0_i32_0 = arith.constant 0 : i32
    return %arg1, %arg2, %c0_i32 : i32, i32, i32
  }
  func.func @transform_3(%arg0: i32, %arg1: i32, %arg2: i32) -> (i32, i32) {
    %c0_i32 = arith.constant 0 : i32
    %c0_i32_0 = arith.constant 0 : i32
    return %arg0, %c0_i32 : i32, i32
  }
}

</mosaic_0001>

<llo_original>
// kernel: ff_chain.1
$region0: #{ff_chain.1}
  #allocation0 [shape = 'u32[]', space=smem, size = 0x4, offset = 0x4, fixed_abs, tag = 'smem constant byte address 0x4 - core index']
  #allocation1 [shape = 'u32[72,128]{1,0:T(1,128)}', space=vmem, size = 0x9000, scoped, tag = 'internal scratch']
  #allocation2 [shape = 'f32[16,128]{1,0:T(8,128)}', space=vmem, size = 0x2000, scoped, tag = 'scratch operand']
  #allocation3 [shape = 'f32[16,128]{1,0:T(8,128)}', space=vmem, size = 0x2000, scoped, tag = 'scratch operand']
  %s0 = inlined_call_operand.vmem [shape: f32[16,128], index: 0, kind: input, shape index: {}]
  %s1 = inlined_call_operand.vmem [shape: f32[4,128,128], index: 1, kind: input, shape index: {}]
  %s2 = inlined_call_operand.vmem [shape: f32[4,128,128], index: 2, kind: input, shape index: {}]
  %s3 = inlined_call_operand.hbm [shape: f32[16,128], index: 3, kind: output, shape index: {}]
  %s4 = sld [smem:[#allocation0]]
  $region61: #{ff_chain.1} parent=0
    _
  %s6 = ssub.s32 1, %s4
  %s7 = scalar_select 0, %s6, %s4
  $region1: #{ff_chain.1} parent=0
    #allocation4 [shape = 'u8[8192]{0}', space=vmem, size = 0x2000, scoped, tag = 'output window, operand 0, single buffered']
    #allocation5 [shape = 's32[2]{0}', space=sflag, size = 0x8, scoped, tag = 'scoped memory for ff_chain.1']
    %8 = vsyncpa [#allocation5], 0
    loop: start=0, step=1, limit=6
    $region2: #{ff_chain.1} parent=1 // loop_pre_header
      _
    $region3: #{ff_chain.1} parent=1 // loop_header
      %s10 = sphi 0, %s14
      %p11 = scmp.ge.s32.totalorder %s10, 6
      %s17 = sphi 0, %s36
      %s18 = sphi 0, %s32
      %s19 = sphi 0, %s28
      %s20 = sphi 0, %s17
      %s21 = sphi 0, %s18
      %s22 = sphi 0, %s19
      %s23 = sphi 0, %s20
      %s24 = sphi 0, %s21
      %s25 = sphi 0, %s22
      %s39 = sphi 0, %s41
      %s42 = sphi 0, %s39
      %s43 = sphi 0, %s42
      %s59 = sphi 0, %s43
      %s67 = sphi 0, %s69
      %s70 = sphi 0, %s67
      %s71 = sphi 0, %s70
      %s87 = sphi 0, %s71
      %s95 = sphi 0, %s97
      %s98 = sphi 0, %s95
      %s99 = sphi 0, %s98
      %s115 = sphi 0, %s99
      %s121 = sphi 0, %s123
      %s124 = sphi 0, %s121
      %s125 = sphi 0, %s124
      %s141 = sphi 0, %s125
    $region4: #{ff_chain.1} parent=1 // loop_header_branch
      %13 = sbr.rel (%p11) target = $region8
    $region5: #{ff_chain.1} parent=1 // loop_body
      %s15 = ssub.s32 %s10, 1
      %s16 = ssub.s32 %s10, 2
      %s26 = sadd.s32 1, %s19
      %p27 = scmp.ge.s32.totalorder %s26, 1
      %s28 = scalar_select %p27, 0, %s26
      %s29 = sadd.s32 1, %s18
      %s30 = scalar_select %p27, %s29, %s18
      %p31 = scmp.ge.s32.totalorder %s30, 4
      %s32 = scalar_select %p31, 0, %s30
      %s33 = sadd.s32 1, %s17
      %s34 = scalar_select %p31, %s33, %s17
      %p35 = scmp.ge.s32.totalorder %s34, 1
      %s36 = scalar_select %p35, 0, %s34
      %s37 = ssub.s32 %s17, %s36
      %p38 = scmp.eq.s32.totalorder %s37, 0
      %s40 = sadd.s32 %s39, 1
      %s41 = scalar_select %p38, %s39, %s40
      %p44 = pneg %p38
      %p45 = scmp.eq.s32.totalorder %s10, 3
      %p46 = por %p44, %p45
      %p47 = scmp.ne.s32.totalorder %s39, %s42
      %p48 = scmp.eq.s32.totalorder %s10, 0
      %p49 = por %p47, %p48
      %p50 = scmp.ne.s32.totalorder %s39, %s42
      %p51 = scmp.eq.s32.totalorder %s15, 3
      %p52 = por %p50, %p51
      %p53 = scmp.ne.s32.totalorder %s42, %s43
      %p54 = scmp.eq.s32.totalorder %s15, 0
      %p55 = por %p53, %p54
      %p56 = scmp.ne.s32.totalorder %s42, %s43
      %p57 = scmp.eq.s32.totalorder %s16, 3
      %p58 = por %p56, %p57
      %p60 = scmp.ne.s32.totalorder %s43, %s59
      %p61 = scmp.eq.s32.totalorder %s16, 0
      %p62 = por %p60, %p61
      %s63 = ssub.s32 %s18, %s32
      %s64 = ssub.s32 %s19, %s28
      %s65 = sor.u32 %s63, %s64
      %p66 = scmp.eq.s32.totalorder %s65, 0
      %s68 = sadd.s32 %s67, 1
      %s69 = scalar_select %p66, %s67, %s68
      %p72 = pneg %p66
      %p73 = scmp.eq.s32.totalorder %s10, 3
      %p74 = por %p72, %p73
      %p75 = scmp.ne.s32.totalorder %s67, %s70
      %p76 = scmp.eq.s32.totalorder %s10, 0
      %p77 = por %p75, %p76
      %p78 = scmp.ne.s32.totalorder %s67, %s70
      %p79 = scmp.eq.s32.totalorder %s15, 3
      %p80 = por %p78, %p79
      %p81 = scmp.ne.s32.totalorder %s70, %s71
      %p82 = scmp.eq.s32.totalorder %s15, 0
      %p83 = por %p81, %p82
      %p84 = scmp.ne.s32.totalorder %s70, %s71
      %p85 = scmp.eq.s32.totalorder %s16, 3
      %p86 = por %p84, %p85
      %p88 = scmp.ne.s32.totalorder %s71, %s87
      %p89 = scmp.eq.s32.totalorder %s16, 0
      %p90 = por %p88, %p89
      %s91 = ssub.s32 %s18, %s32
      %s92 = ssub.s32 %s19, %s28
      %s93 = sor.u32 %s91, %s92
      %p94 = scmp.eq.s32.totalorder %s93, 0
      %s96 = sadd.s32 %s95, 1
      %s97 = scalar_select %p94, %s95, %s96
      %p100 = pneg %p94
      %p101 = scmp.eq.s32.totalorder %s10, 3
      %p102 = por %p100, %p101
      %p103 = scmp.ne.s32.totalorder %s95, %s98
      %p104 = scmp.eq.s32.totalorder %s10, 0
      %p105 = por %p103, %p104
      %p106 = scmp.ne.s32.totalorder %s95, %s98
      %p107 = scmp.eq.s32.totalorder %s15, 3
      %p108 = por %p106, %p107
      %p109 = scmp.ne.s32.totalorder %s98, %s99
      %p110 = scmp.eq.s32.totalorder %s15, 0
      %p111 = por %p109, %p110
      %p112 = scmp.ne.s32.totalorder %s98, %s99
      %p113 = scmp.eq.s32.totalorder %s16, 3
      %p114 = por %p112, %p113
      %p116 = scmp.ne.s32.totalorder %s99, %s115
      %p117 = scmp.eq.s32.totalorder %s16, 0
      %p118 = por %p116, %p117
      %s119 = ssub.s32 %s17, %s36
      %p120 = scmp.eq.s32.totalorder %s119, 0
      %s122 = sadd.s32 %s121, 1
      %s123 = scalar_select %p120, %s121, %s122
      %p126 = pneg %p120
      %p127 = scmp.eq.s32.totalorder %s10, 3
      %p128 = por %p126, %p127
      %p129 = scmp.ne.s32.totalorder %s121, %s124
      %p130 = scmp.eq.s32.totalorder %s10, 0
      %p131 = por %p129, %p130
      %p132 = scmp.ne.s32.totalorder %s121, %s124
      %p133 = scmp.eq.s32.totalorder %s15, 3
      %p134 = por %p132, %p133
      %p135 = scmp.ne.s32.totalorder %s124, %s125
      %p136 = scmp.eq.s32.totalorder %s15, 0
      %p137 = por %p135, %p136
      %p138 = scmp.ne.s32.totalorder %s124, %s125
      %p139 = scmp.eq.s32.totalorder %s16, 3
      %p140 = por %p138, %p139
      %p142 = scmp.ne.s32.totalorder %s125, %s141
      %p143 = scmp.eq.s32.totalorder %s16, 0
      %p144 = por %p142, %p143
      %p145 = scmp.le.s32.totalorder 1, %s10
      %p146 = scmp.lt.s32.totalorder %s10, 5
      %p147 = pnand %p145, %p146
      %p148 = pneg %p147
      // Predicated region
      $region9: #{ff_chain.1} parent=5 // pred_check
        _
      $region10: #{ff_chain.1} parent=5 // pred_check_branch
        %150 = sbr.rel (%p147) target = $region12
      $region11: #{ff_chain.1} parent=5 // pred_region
        %s151 = ssub.s32 %s10, 1
        // Predicated region
        $region13: #{ff_chain.1} parent=11 // pred_check
          %p152 = pneg %p55
        $region14: #{ff_chain.1} parent=11 // pred_check_branch
          %154 = sbr.rel (%p152) target = $region16
        $region15: #{ff_chain.1} parent=11 // pred_region
          %s155 = smul.u32 2, %s20
          %p156 = scmp.lt.s32.totalorder %s155, 1
          %s157 = scalar_select %p156, %s155, 1
          %s158 = smul.addr %s157, 8
          %s159 = scalar_lea.vmem %s0, %s158
          %s160 = smul.u32 2, %s20
        $region16: #{ff_chain.1} parent=11 // pred_fallthru
          _
      $region12: #{ff_chain.1} parent=5 // pred_fallthru
        _
      %p161 = scmp.lt.s32.totalorder %s10, 4
      // Predicated region
      $region17: #{ff_chain.1} parent=5 // pred_check
        %p162 = pneg %p161
      $region18: #{ff_chain.1} parent=5 // pred_check_branch
        %164 = sbr.rel (%p162) target = $region20
      $region19: #{ff_chain.1} parent=5 // pred_region
        // Predicated region
        $region21: #{ff_chain.1} parent=19 // pred_check
          %p165 = pneg %p77
        $region22: #{ff_chain.1} parent=19 // pred_check_branch
          %167 = sbr.rel (%p165) target = $region24
        $region23: #{ff_chain.1} parent=19 // pred_region
          %p168 = scmp.lt.s32.totalorder %s18, 3
          %s169 = scalar_select %p168, %s18, 3
          %p170 = scmp.lt.s32.totalorder %s19, 0
          %s171 = scalar_select %p170, %s19, 0
          %s172 = smul.addr %s169, 16
          %s173 = sadd.s32 %s171, %s172
          %s174 = smul.addr %s173, 8
          %s175 = scalar_lea.vmem %s1, %s174
        $region24: #{ff_chain.1} parent=19 // pred_fallthru
          _
        // Predicated region
        $region25: #{ff_chain.1} parent=19 // pred_check
          %p176 = pneg %p105
        $region26: #{ff_chain.1} parent=19 // pred_check_branch
          %178 = sbr.rel (%p176) target = $region28
        $region27: #{ff_chain.1} parent=19 // pred_region
          %s179 = smul.u32 16, %s19
          %p180 = scmp.lt.s32.totalorder %s18, 3
          %s181 = scalar_select %p180, %s18, 3
          %p182 = scmp.lt.s32.totalorder %s179, 15
          %s183 = scalar_select %p182, %s179, 15
          %s184 = smul.addr %s181, 16
          %s185 = sadd.s32 %s183, %s184
          %s186 = smul.addr %s185, 8
          %s187 = scalar_lea.vmem %s2, %s186
          %s188 = smul.u32 16, %s19
        $region28: #{ff_chain.1} parent=19 // pred_fallthru
          _
      $region20: #{ff_chain.1} parent=5 // pred_fallthru
        _
      %p189 = scmp.le.s32.totalorder 1, %s10
      %p190 = scmp.lt.s32.totalorder %s10, 5
      %p191 = pnand %p189, %p190
      %p192 = pneg %p191
      // Predicated region
      $region29: #{ff_chain.1} parent=5 // pred_check
        _
      $region30: #{ff_chain.1} parent=5 // pred_check_branch
        %194 = sbr.rel (%p191) target = $region32
      $region31: #{ff_chain.1} parent=5 // pred_region
        %s195 = ssub.s32 %s10, 1
        %s196 = smul.u32 2, %s20
        %p197 = scmp.lt.s32.totalorder %s196, 1
        %s198 = scalar_select %p197, %s196, 1
        %s199 = smul.addr %s198, 8
        %s200 = scalar_lea.vmem %s0, %s199
        %p201 = pneg %p55
        %p202 = pneg %p52
        %p203 = scmp.lt.s32.totalorder %s21, 3
        %s204 = scalar_select %p203, %s21, 3
        %p205 = scmp.lt.s32.totalorder %s22, 0
        %s206 = scalar_select %p205, %s22, 0
        %s207 = smul.addr %s204, 16
        %s208 = sadd.s32 %s206, %s207
        %s209 = smul.addr %s208, 8
        %s210 = scalar_lea.vmem %s1, %s209
        %p211 = pneg %p83
        %p212 = pneg %p80
        %s213 = smul.u32 16, %s22
        %p214 = scmp.lt.s32.totalorder %s21, 3
        %s215 = scalar_select %p214, %s21, 3
        %p216 = scmp.lt.s32.totalorder %s213, 15
        %s217 = scalar_select %p216, %s213, 15
        %s218 = smul.addr %s215, 16
        %s219 = sadd.s32 %s217, %s218
        %s220 = smul.addr %s219, 8
        %s221 = scalar_lea.vmem %s2, %s220
        %p222 = pneg %p111
        %p223 = pneg %p108
        %p224 = pneg %p137
        %p225 = pneg %p134
        %s226 = smul.u32 2, %s20
        %p227 = scmp.lt.s32.totalorder %s226, 1
        %s228 = scalar_select %p227, %s226, 1
        %s229 = smul.addr %s228, 8
        %s230 = scalar_lea.vmem %s0, %s229
        %s231 = smul.u32 2, %s20
        %p232 = scmp.lt.s32.totalorder %s21, 3
        %s233 = scalar_select %p232, %s21, 3
        %p234 = scmp.lt.s32.totalorder %s22, 0
        %s235 = scalar_select %p234, %s22, 0
        %s236 = smul.addr %s233, 16
        %s237 = sadd.s32 %s235, %s236
        %s238 = smul.addr %s237, 8
        %s239 = scalar_lea.vmem %s1, %s238
        %s240 = smul.u32 16, %s22
        %p241 = scmp.lt.s32.totalorder %s21, 3
        %s242 = scalar_select %p241, %s21, 3
        %p243 = scmp.lt.s32.totalorder %s240, 15
        %s244 = scalar_select %p243, %s240, 15
        %s245 = smul.addr %s242, 16
        %s246 = sadd.s32 %s244, %s245
        %s247 = smul.addr %s246, 8
        %s248 = scalar_lea.vmem %s2, %s247
        %s249 = smul.u32 16, %s22
        %s250 = smul.u32 2, %s20
        %p251 = scmp.eq.s32.totalorder %s21, 0
        %p252 = scmp.eq.s32.totalorder %s22, 0
        %p253 = pnand %p251, %p252
        %p254 = pneg %p253
        // Predicated region
        $region33: #{ff_chain.1} parent=31 // pred_check
          _
        $region34: #{ff_chain.1} parent=31 // pred_check_branch
          %256 = sbr.rel (%p253) target = $region36
        $region35: #{ff_chain.1} parent=31 // pred_region
          %v257 = vld [vmem:[%s230] sm:$0xff]
          %v258 = vld [vmem:[%s230 + $0x8] sm:$0xff]
          %259 = vst [vmem:[#allocation2] sm:$0xff] %v257
          %260 = vst [vmem:[#allocation2 + $0x8] sm:$0xff] %v258
        $region36: #{ff_chain.1} parent=31 // pred_fallthru
          _
        // Predicated region
        $region37: #{ff_chain.1} parent=31 // pred_check
          %p261 = pneg %p252
        $region38: #{ff_chain.1} parent=31 // pred_check_branch
          %263 = sbr.rel (%p261) target = $region40
        $region39: #{ff_chain.1} parent=31 // pred_region
          %264 = vst [vmem:[#allocation3] sm:$0xff] 0.0
          %265 = vst [vmem:[#allocation3 + $0x8] sm:$0xff] 0.0
        $region40: #{ff_chain.1} parent=31 // pred_fallthru
          _
        %v266 = vld [vmem:[#allocation2] sm:$0xff]
        %v267 = vld [vmem:[#allocation2 + $0x8] sm:$0xff]
        %v268 = vld [vmem:[%s239] sm:$0xff]
        %v269 = vld [vmem:[%s239 + $0x8] sm:$0xff]
        %v270 = vld [vmem:[%s239 + $0x10] sm:$0xff]
        %v271 = vld [vmem:[%s239 + $0x18] sm:$0xff]
        %v272 = vld [vmem:[%s239 + $0x20] sm:$0xff]
        %v273 = vld [vmem:[%s239 + $0x28] sm:$0xff]
        %v274 = vld [vmem:[%s239 + $0x30] sm:$0xff]
        %v275 = vld [vmem:[%s239 + $0x38] sm:$0xff]
        %v276 = vld [vmem:[%s239 + $0x40] sm:$0xff]
        %v277 = vld [vmem:[%s239 + $0x48] sm:$0xff]
        %v278 = vld [vmem:[%s239 + $0x50] sm:$0xff]
        %v279 = vld [vmem:[%s239 + $0x58] sm:$0xff]
        %v280 = vld [vmem:[%s239 + $0x60] sm:$0xff]
        %v281 = vld [vmem:[%s239 + $0x68] sm:$0xff]
        %v282 = vld [vmem:[%s239 + $0x70] sm:$0xff]
        %v283 = vld [vmem:[%s239 + $0x78] sm:$0xff]
        %284 = vmatpush.msra.mxu0 %v283
        %285 = vmatpush.msra.mxu0 %v282
        %286 = vmatpush.msra.mxu0 %v281
        %287 = vmatpush.msra.mxu0 %v280
        %288 = vmatpush.msra.mxu0 %v279
        %289 = vmatpush.msra.mxu0 %v278
        %290 = vmatpush.msra.mxu0 %v277
        %291 = vmatpush.msra.mxu0 %v276
        %292 = vmatpush.msra.mxu0 %v275
        %293 = vmatpush.msra.mxu0 %v274
        %294 = vmatpush.msra.mxu0 %v273
        %295 = vmatpush.msra.mxu0 %v272
        %296 = vmatpush.msra.mxu0 %v271
        %297 = vmatpush.msra.mxu0 %v270
        %298 = vmatpush.msra.mxu0 %v269
        %299 = vmatpush.msra.mxu0 %v268
        %300 = vmatmul.f32.gmra.mxu0 %v266
        %v301 = vpop.f32.mrf.mxu0
        %v302 = vadd.f32 0.0, %v301
        %303 = vmatmul.f32.gmra.mxu0 %v267
        %v304 = vpop.f32.mrf.mxu0
        %v305 = vadd.f32 0.0, %v304
        %306 = vdwg.mxu0
        %v307 = vmul.f32 %v302, %v302
        %v308 = vmul.f32 %v305, %v305
        %v309 = vmul.f32 %v302, %v307
        %v310 = vmul.f32 %v305, %v308
        %v311 = vmul.f32 %v309, 0.044715
        %v312 = vmul.f32 %v310, 0.044715
        %v313 = vadd.f32 %v302, %v311
        %v314 = vadd.f32 %v305, %v312
        %v315 = vmul.f32 %v313, 0.7978846
        %v316 = vmul.f32 %v314, 0.7978846
        %v317 = vtanh.pop %v315
        %v318 = vtanh.pop %v316
        %v319 = vadd.f32 %v317, 1.0
        %v320 = vadd.f32 %v318, 1.0
        %v321 = vmul.f32 %v319, 0.5
        %v322 = vmul.f32 %v320, 0.5
        %v323 = vmul.f32 %v302, %v321
        %v324 = vmul.f32 %v305, %v322
        %v325 = vld [vmem:[#allocation3] sm:$0xff]
        %v326 = vld [vmem:[#allocation3 + $0x8] sm:$0xff]
        %v327 = vld [vmem:[%s248] sm:$0xff]
        %v328 = vld [vmem:[%s248 + $0x8] sm:$0xff]
        %v329 = vld [vmem:[%s248 + $0x10] sm:$0xff]
        %v330 = vld [vmem:[%s248 + $0x18] sm:$0xff]
        %v331 = vld [vmem:[%s248 + $0x20] sm:$0xff]
        %v332 = vld [vmem:[%s248 + $0x28] sm:$0xff]
        %v333 = vld [vmem:[%s248 + $0x30] sm:$0xff]
        %v334 = vld [vmem:[%s248 + $0x38] sm:$0xff]
        %v335 = vld [vmem:[%s248 + $0x40] sm:$0xff]
        %v336 = vld [vmem:[%s248 + $0x48] sm:$0xff]
        %v337 = vld [vmem:[%s248 + $0x50] sm:$0xff]
        %v338 = vld [vmem:[%s248 + $0x58] sm:$0xff]
        %v339 = vld [vmem:[%s248 + $0x60] sm:$0xff]
        %v340 = vld [vmem:[%s248 + $0x68] sm:$0xff]
        %v341 = vld [vmem:[%s248 + $0x70] sm:$0xff]
        %v342 = vld [vmem:[%s248 + $0x78] sm:$0xff]
        %343 = vmatpush.msra.mxu0 %v342
        %344 = vmatpush.msra.mxu0 %v341
        %345 = vmatpush.msra.mxu0 %v340
        %346 = vmatpush.msra.mxu0 %v339
        %347 = vmatpush.msra.mxu0 %v338
        %348 = vmatpush.msra.mxu0 %v337
        %349 = vmatpush.msra.mxu0 %v336
        %350 = vmatpush.msra.mxu0 %v335
        %351 = vmatpush.msra.mxu0 %v334
        %352 = vmatpush.msra.mxu0 %v333
        %353 = vmatpush.msra.mxu0 %v332
        %354 = vmatpush.msra.mxu0 %v331
        %355 = vmatpush.msra.mxu0 %v330
        %356 = vmatpush.msra.mxu0 %v329
        %357 = vmatpush.msra.mxu0 %v328
        %358 = vmatpush.msra.mxu0 %v327
        %359 = vmatmul.f32.gmra.mxu0 %v323
        %v360 = vpop.f32.mrf.mxu0
        %v361 = vadd.f32 0.0, %v360
        %362 = vmatmul.f32.gmra.mxu0 %v324
        %v363 = vpop.f32.mrf.mxu0
        %v364 = vadd.f32 0.0, %v363
        %365 = vdwg.mxu0
        %v366 = vadd.f32 %v325, %v361
        %v367 = vadd.f32 %v326, %v364
        %368 = vst [vmem:[#allocation3] sm:$0xff] %v366
        %369 = vst [vmem:[#allocation3 + $0x8] sm:$0xff] %v367
        // Predicated region
        $region41: #{ff_chain.1} parent=31 // pred_check
          %p370 = pneg %p252
        $region42: #{ff_chain.1} parent=31 // pred_check_branch
          %372 = sbr.rel (%p370) target = $region44
        $region43: #{ff_chain.1} parent=31 // pred_region
          %v373 = vld [vmem:[#allocation2] sm:$0xff]
          %v374 = vld [vmem:[#allocation2 + $0x8] sm:$0xff]
          %v375 = vld [vmem:[#allocation3] sm:$0xff]
          %v376 = vld [vmem:[#allocation3 + $0x8] sm:$0xff]
          %v377 = vadd.f32 %v373, %v375
          %v378 = vadd.f32 %v374, %v376
          %379 = vst [vmem:[#allocation2] sm:$0xff] %v377
          %380 = vst [vmem:[#allocation2 + $0x8] sm:$0xff] %v378
        $region44: #{ff_chain.1} parent=31 // pred_fallthru
          _
        %p381 = scmp.eq.s32.totalorder %s21, 3
        %p382 = pnand %p381, %p252
        %p383 = pneg %p382
        // Predicated region
        $region45: #{ff_chain.1} parent=31 // pred_check
          _
        $region46: #{ff_chain.1} parent=31 // pred_check_branch
          %385 = sbr.rel (%p382) target = $region48
        $region47: #{ff_chain.1} parent=31 // pred_region
          %v386 = vld [vmem:[#allocation2] sm:$0xff]
          %v387 = vld [vmem:[#allocation2 + $0x8] sm:$0xff]
          %388 = vst [vmem:[#allocation4] sm:$0xff] %v386
          %389 = vst [vmem:[#allocation4 + $0x8] sm:$0xff] %v387
        $region48: #{ff_chain.1} parent=31 // pred_fallthru
          _
        // Predicated region
        $region49: #{ff_chain.1} parent=31 // pred_check
          %p390 = pneg %p134
        $region50: #{ff_chain.1} parent=31 // pred_check_branch
          %392 = sbr.rel (%p390) target = $region52
        $region51: #{ff_chain.1} parent=31 // pred_region
          %s393 = smul.u32 2, %s20
          %395 = vsyncadd [#allocation5], 0
          %s396 = smul.addr %s393, 8
          %s397 = scalar_lea.hbm %s3, %s396
          %s398 = sshll.u32 [#allocation4], 4
          %s399 = int_to_ptr.vmem [resolvable:$true] %s398
          %s400 = sshll.u32 %s397, 4
          %s401 = int_to_ptr.hbm [resolvable:$true] %s400
          %406 = dma.vmem_to_hbm [thread:$0]  %s399, 256, %s401, [#allocation5], 128, 128, 8
        $region52: #{ff_chain.1} parent=31 // pred_fallthru
          _
        // Predicated region
        $region53: #{ff_chain.1} parent=31 // pred_check
          %p407 = pneg %p134
        $region54: #{ff_chain.1} parent=31 // pred_check_branch
          %409 = sbr.rel (%p407) target = $region56
        $region55: #{ff_chain.1} parent=31 // pred_region
          %411 = dma.done [#allocation5], 256
        $region56: #{ff_chain.1} parent=31 // pred_fallthru
          _
      $region32: #{ff_chain.1} parent=5 // pred_fallthru
        _
      %p412 = scmp.le.s32.totalorder 2, %s10
      // Predicated region
      $region57: #{ff_chain.1} parent=5 // pred_check
        %p413 = pneg %p412
      $region58: #{ff_chain.1} parent=5 // pred_check_branch
        %415 = sbr.rel (%p413) target = $region60
      $region59: #{ff_chain.1} parent=5 // pred_region
        %s416 = ssub.s32 %s10, 2
      $region60: #{ff_chain.1} parent=5 // pred_fallthru
        _
    $region6: #{ff_chain.1} parent=1 // loop_footer
      %s14 = sadd.s32 1, %s10
    $region7: #{ff_chain.1} parent=1 // loop_footer_branch
      %9 = sbr.rel target = $region3
    $region8: #{ff_chain.1} parent=1 // loop_exit
      _
    %417 = vsyncpa [#allocation5], 1
    %s418 = scalar_lea.sflag [#allocation5], 1
    %419 = vsyncpa %s418, 1

</llo_original>
